<compile_context>
chip_gen: v7x
topology: tpu7x:2x2x1
jax: 0.10.0
libtpu: 0.0.40
codegen_flags: <defaults>
</compile_context>

<pallas_src>
import jax
import jax.numpy as jnp
from jax.experimental import pallas as pl
from jax.experimental.pallas import tpu as pltpu


def _round_up(n, m):
    return ((n + m - 1) // m) * m


def mlp_kernel(x_ref, w1_ref, b1_ref, w2_ref, b2_ref, o_ref):
    # x arrives as raw f32; cast to bf16 (MXU-native) in-kernel (free under HBM bound).
    xb = x_ref[...].astype(jnp.bfloat16)
    h = jnp.dot(xb, w1_ref[...], preferred_element_type=jnp.float32)
    h = jnp.maximum(h + b1_ref[...], 0.0)                       # bias + ReLU in f32
    y = jnp.dot(h.astype(jnp.bfloat16), w2_ref[...],
                preferred_element_type=jnp.float32) + b2_ref[...]
    o_ref[...] = y.astype(o_ref.dtype)


def mlp1_forward(x, w1, b1, w2, b2, *, tm_max=4096):
    """Fused MLP forward with a batch grid.

    x:  (B, in_dim) float32
    w1: (in_dim, hidden), b1: (hidden,) or (1, hidden)
    w2: (hidden, out_dim), b2: (out_dim,) or (1, out_dim)
    Returns (B, out_dim) in x.dtype.
    """
    B, in_dim = x.shape
    hidden = w1.shape[1]
    out_dim = w2.shape[1]
    out_dtype = x.dtype

    # Batch tile: multiple of 8 sublanes, capped at tm_max, and capped at ~B/2 so
    # large batches always yield >=2 grid steps (both v7x TensorCores engage).
    tm = max(8, min(tm_max, _round_up(pl.cdiv(B, 2), 8)))
    grid = (pl.cdiv(B, tm),)

    # Tiny one-time casts/reshapes for the resident operands (negligible traffic).
    w1b = w1.astype(jnp.bfloat16)
    w2b = w2.astype(jnp.bfloat16)
    b1f = b1.reshape(1, hidden).astype(jnp.float32)
    b2f = b2.reshape(1, out_dim).astype(jnp.float32)

    out = pl.pallas_call(
        mlp_kernel,
        out_shape=jax.ShapeDtypeStruct((B, out_dim), jnp.float32),
        grid=grid,
        in_specs=[
            pl.BlockSpec((tm, in_dim), lambda i: (i, 0)),      # x: tiled over batch
            pl.BlockSpec((in_dim, hidden), lambda i: (0, 0)),  # w1: resident
            pl.BlockSpec((1, hidden), lambda i: (0, 0)),       # b1: resident
            pl.BlockSpec((hidden, out_dim), lambda i: (0, 0)),  # w2: resident
            pl.BlockSpec((1, out_dim), lambda i: (0, 0)),      # b2: resident
        ],
        out_specs=pl.BlockSpec((tm, out_dim), lambda i: (i, 0)),
        compiler_params=pltpu.CompilerParams(
            dimension_semantics=("parallel",),   # batch axis -> free 2x on v7x megacore
        ),
    )(x, w1b, b1f, w2b, b2f)

    return out.astype(out_dtype)


def init_params(key, in_dim, hidden, out_dim, dtype=jnp.float32):
    """Deterministic synthetic init (uniform ~ PyTorch nn.Linear default bounds)."""
    k1, k2, k3, k4 = jax.random.split(key, 4)
    bound1 = 1.0 / jnp.sqrt(in_dim)
    bound2 = 1.0 / jnp.sqrt(hidden)
    w1 = jax.random.uniform(k1, (in_dim, hidden), dtype, -bound1, bound1)
    b1 = jax.random.uniform(k2, (1, hidden), dtype, -bound1, bound1)
    w2 = jax.random.uniform(k3, (hidden, out_dim), dtype, -bound2, bound2)
    b2 = jax.random.uniform(k4, (1, out_dim), dtype, -bound2, bound2)
    return w1, b1, w2, b2


def _ref_bf16(x, w1, b1, w2, b2):
    """Pure-JAX reference using the same bf16-input / f32-accumulate arithmetic."""
    xb, w1b, w2b = (a.astype(jnp.bfloat16) for a in (x, w1, w2))
    h = jnp.maximum(jnp.dot(xb, w1b, preferred_element_type=jnp.float32)
                    + b1.reshape(1, -1), 0.0)
    return jnp.dot(h.astype(jnp.bfloat16), w2b,
                   preferred_element_type=jnp.float32) + b2.reshape(1, -1)


if __name__ == "__main__":
    # Crop-recommendation-like shapes: 7 input features, 22 output classes.
    batch, in_dim, hidden, out_dim = 8, 7, 64, 22

    key = jax.random.PRNGKey(0)
    kx, kp = jax.random.split(key)
    x = jax.random.normal(kx, (batch, in_dim), jnp.float32)
    w1, b1, w2, b2 = init_params(kp, in_dim, hidden, out_dim)

    fwd = jax.jit(mlp1_forward)
    out = fwd(x, w1, b1, w2, b2)
    jax.block_until_ready(out)
    assert out.shape == (batch, out_dim)

    # Reference 1: same math with bf16 matmul inputs (matches kernel arithmetic).
    assert jnp.allclose(out, _ref_bf16(x, w1, b1, w2, b2), atol=1e-5, rtol=1e-5)

    # Reference 2: full f32 math (loose tolerance due to bf16 MXU inputs).
    ref_f32 = jnp.maximum(x @ w1 + b1, 0.0) @ w2 + b2
    assert jnp.allclose(out, ref_f32, atol=5e-2, rtol=5e-2)

    # Ragged-batch check: B not a multiple of the tile / grid has >1 step.
    x2 = jax.random.normal(jax.random.PRNGKey(1), (13, in_dim), jnp.float32)
    out2 = jax.jit(lambda *a: mlp1_forward(*a, tm_max=8))(x2, w1, b1, w2, b2)
    jax.block_until_ready(out2)
    assert out2.shape == (13, out_dim)
    assert jnp.allclose(out2, _ref_bf16(x2, w1, b1, w2, b2), atol=1e-5, rtol=1e-5)

    print("KERNEL_OK")
</pallas_src>

<mosaic_0001>
module attributes {stable_mosaic.version = 11 : i64} {
  func.func @mlp_kernel(%arg0: i32, %arg1: memref<8x7xf32, #tpu.memory_space<vmem>>, %arg2: memref<7x64xbf16, #tpu.memory_space<vmem>>, %arg3: memref<1x64xf32, #tpu.memory_space<vmem>>, %arg4: memref<64x22xbf16, #tpu.memory_space<vmem>>, %arg5: memref<1x22xf32, #tpu.memory_space<vmem>>, %arg6: memref<8x22xf32, #tpu.memory_space<vmem>>) attributes {dimension_semantics = [#tpu.dimension_semantics<parallel>], iteration_bounds = array<i64: 1>, scalar_prefetch = 0 : i64, scratch_operands = 0 : i64, tpu.core_type = #tpu.core_type<tc>, window_params = [{transform_indices = @transform_0, window_bounds = array<i64: 8, 7>}, {pipeline_mode = #tpu.pipeline_mode<synchronous>, transform_indices = @transform_1, window_bounds = array<i64: 7, 64>}, {pipeline_mode = #tpu.pipeline_mode<synchronous>, transform_indices = @transform_2, window_bounds = array<i64: 1, 64>}, {pipeline_mode = #tpu.pipeline_mode<synchronous>, transform_indices = @transform_3, window_bounds = array<i64: 64, 22>}, {pipeline_mode = #tpu.pipeline_mode<synchronous>, transform_indices = @transform_4, window_bounds = array<i64: 1, 22>}, {transform_indices = @transform_5, window_bounds = array<i64: 8, 22>}]} {
    %c0 = arith.constant 0 : index
    %c0_0 = arith.constant 0 : index
    %0 = vector.load %arg1[%c0, %c0_0] : memref<8x7xf32, #tpu.memory_space<vmem>>, vector<8x7xf32>
    %1 = arith.truncf %0 : vector<8x7xf32> to vector<8x7xbf16>
    %c0_1 = arith.constant 0 : index
    %c0_2 = arith.constant 0 : index
    %2 = vector.load %arg2[%c0_1, %c0_2] : memref<7x64xbf16, #tpu.memory_space<vmem>>, vector<7x64xbf16>
    %cst = arith.constant dense<0.000000e+00> : vector<8x64xf32>
    %3 = tpu.matmul %1, %2, %cst {dimension_numbers = #tpu.dot_dimension_numbers<[1], [0], [0], [1], [0, 0, 1, 1], [], []>} : vector<8x7xbf16>, vector<7x64xbf16>, vector<8x64xf32> -> vector<8x64xf32>
    %c0_3 = arith.constant 0 : index
    %c0_4 = arith.constant 0 : index
    %4 = vector.load %arg3[%c0_3, %c0_4] : memref<1x64xf32, #tpu.memory_space<vmem>>, vector<1x64xf32>
    %5 = vector.broadcast %4 : vector<1x64xf32> to vector<8x64xf32>
    %6 = arith.addf %3, %5 : vector<8x64xf32>
    %cst_5 = arith.constant 0.000000e+00 : f32
    %7 = vector.broadcast %cst_5 : f32 to vector<8x64xf32>
    %8 = arith.maximumf %6, %7 : vector<8x64xf32>
    %9 = arith.truncf %8 : vector<8x64xf32> to vector<8x64xbf16>
    %c0_6 = arith.constant 0 : index
    %c0_7 = arith.constant 0 : index
    %10 = vector.load %arg4[%c0_6, %c0_7] : memref<64x22xbf16, #tpu.memory_space<vmem>>, vector<64x22xbf16>
    %cst_8 = arith.constant dense<0.000000e+00> : vector<8x22xf32>
    %11 = tpu.matmul %9, %10, %cst_8 {dimension_numbers = #tpu.dot_dimension_numbers<[1], [0], [0], [1], [0, 0, 1, 1], [], []>} : vector<8x64xbf16>, vector<64x22xbf16>, vector<8x22xf32> -> vector<8x22xf32>
    %c0_9 = arith.constant 0 : index
    %c0_10 = arith.constant 0 : index
    %12 = vector.load %arg5[%c0_9, %c0_10] : memref<1x22xf32, #tpu.memory_space<vmem>>, vector<1x22xf32>
    %13 = vector.broadcast %12 : vector<1x22xf32> to vector<8x22xf32>
    %14 = arith.addf %11, %13 : vector<8x22xf32>
    %c0_11 = arith.constant 0 : index
    %c0_12 = arith.constant 0 : index
    %15 = vector.load %arg6[%c0_11, %c0_12] : memref<8x22xf32, #tpu.memory_space<vmem>>, vector<8x22xf32>
    tpu.vector_store %arg6[%c0_11, %c0_12], %14 {strides = array<i32>} : memref<8x22xf32, #tpu.memory_space<vmem>>, vector<8x22xf32>,
    return
  }
  func.func @transform_0(%arg0: i32) -> (i32, i32) {
    %c0_i32 = arith.constant 0 : i32
    %c0_i32_0 = arith.constant 0 : i32
    return %arg0, %c0_i32 : i32, i32
  }
  func.func @transform_1(%arg0: i32) -> (i32, i32) {
    %c0_i32 = arith.constant 0 : i32
    %c0_i32_0 = arith.constant 0 : i32
    %c0_i32_1 = arith.constant 0 : i32
    return %c0_i32, %c0_i32_0 : i32, i32
  }
  func.func @transform_2(%arg0: i32) -> (i32, i32) {
    %c0_i32 = arith.constant 0 : i32
    %c0_i32_0 = arith.constant 0 : i32
    %c0_i32_1 = arith.constant 0 : i32
    return %c0_i32, %c0_i32_0 : i32, i32
  }
  func.func @transform_3(%arg0: i32) -> (i32, i32) {
    %c0_i32 = arith.constant 0 : i32
    %c0_i32_0 = arith.constant 0 : i32
    %c0_i32_1 = arith.constant 0 : i32
    return %c0_i32, %c0_i32_0 : i32, i32
  }
  func.func @transform_4(%arg0: i32) -> (i32, i32) {
    %c0_i32 = arith.constant 0 : i32
    %c0_i32_0 = arith.constant 0 : i32
    %c0_i32_1 = arith.constant 0 : i32
    return %c0_i32, %c0_i32_0 : i32, i32
  }
  func.func @transform_5(%arg0: i32) -> (i32, i32) {
    %c0_i32 = arith.constant 0 : i32
    %c0_i32_0 = arith.constant 0 : i32
    return %arg0, %c0_i32 : i32, i32
  }
}

</mosaic_0001>

<llo_original>
// kernel: mlp1_forward.1
$region0: #{mlp1_forward.1}
  #allocation0 [shape = 'u32[]', space=smem, size = 0x4, offset = 0x4, fixed_abs, tag = 'smem constant byte address 0x4 - core index']
  #allocation1 [shape = 'u32[144,128]{1,0:T(1,128)}', space=vmem, size = 0x12000, scoped, tag = 'internal scratch']
  %s0 = inlined_call_operand.vmem [shape: f32[8,7], index: 0, kind: input, shape index: {}]
  %s1 = inlined_call_operand.vmem [shape: bf16[7,64], index: 1, kind: input, shape index: {}]
  %s2 = inlined_call_operand.vmem [shape: f32[1,64], index: 2, kind: input, shape index: {}]
  %s3 = inlined_call_operand.vmem [shape: bf16[64,22], index: 3, kind: input, shape index: {}]
  %s4 = inlined_call_operand.vmem [shape: f32[1,22], index: 4, kind: input, shape index: {}]
  %s5 = inlined_call_operand.hbm [shape: f32[8,22], index: 5, kind: output, shape index: {}]
  %s6 = sld [smem:[#allocation0]]
  $region30: #{mlp1_forward.1} parent=0
    _
  %s8 = ssub.s32 1, %s6
  %s9 = scalar_select 0, %s8, %s6
  $region1: #{mlp1_forward.1} parent=0
    #allocation2 [shape = 'u8[4096]{0}', space=vmem, size = 0x1000, scoped, tag = 'output window, operand 0, single buffered']
    #allocation3 [shape = 's32[1]{0}', space=sflag, size = 0x4, scoped, tag = 'scoped memory for mlp1_forward.1']
    %10 = vsyncpa [#allocation3], 0
    // Predicated region
    $region2: #{mlp1_forward.1} parent=1 // pred_check
      _
    $region3: #{mlp1_forward.1} parent=1 // pred_check_branch
      %12 = sbr.rel (0) target = $region5
    $region4: #{mlp1_forward.1} parent=1 // pred_region
      _
    $region5: #{mlp1_forward.1} parent=1 // pred_fallthru
      _
    // Predicated region
    $region6: #{mlp1_forward.1} parent=1 // pred_check
      _
    $region7: #{mlp1_forward.1} parent=1 // pred_check_branch
      %14 = sbr.rel (0) target = $region9
    $region8: #{mlp1_forward.1} parent=1 // pred_region
      _
    $region9: #{mlp1_forward.1} parent=1 // pred_fallthru
      _
    // Predicated region
    $region10: #{mlp1_forward.1} parent=1 // pred_check
      _
    $region11: #{mlp1_forward.1} parent=1 // pred_check_branch
      %16 = sbr.rel (0) target = $region13
    $region12: #{mlp1_forward.1} parent=1 // pred_region
      _
    $region13: #{mlp1_forward.1} parent=1 // pred_fallthru
      _
    // Predicated region
    $region14: #{mlp1_forward.1} parent=1 // pred_check
      _
    $region15: #{mlp1_forward.1} parent=1 // pred_check_branch
      %18 = sbr.rel (0) target = $region17
    $region16: #{mlp1_forward.1} parent=1 // pred_region
      _
    $region17: #{mlp1_forward.1} parent=1 // pred_fallthru
      _
    // Predicated region
    $region18: #{mlp1_forward.1} parent=1 // pred_check
      _
    $region19: #{mlp1_forward.1} parent=1 // pred_check_branch
      %20 = sbr.rel (0) target = $region21
    $region20: #{mlp1_forward.1} parent=1 // pred_region
      _
    $region21: #{mlp1_forward.1} parent=1 // pred_fallthru
      _
    %v22 = vld [vmem:[%s0] sm:$0xff]
    %v23 = vpack.c.bf16 %v22, %v22
    %v24 = vld [vmem:[%s1] sm:$0xf]
    %v25 = vld [vmem:[%s2] sm:$0x1]
    %v27 = vlaneseq
    %v28 = vshrl.u32 %v27, 7
    %v29 = vsub.s32 0, %v28
    %v30 = vrot.slane %v25, %v29
    %vm32 = vcmask 56320
    %v34 = vsel %vm32, %v23, 0
    %vm36 = vcmask 1042432
    %vm37 = vcmask 1043456
    %v38 = vsel %vm36, 4294967295, 65535
    %v39 = vsel %vm37, %v38, 0
    %v41 = vand.u32 %v24, %v39
    %43 = vmatprep.subr.bf16.mxu0 0
    %44 = vmatpush1.bf16.msra.mxu0 %v41
    %45 = vmatprep.subr.bf16.mxu0 0
    %46 = vmatpush1.bf16.msra.mxu0 0
    %47 = vmatprep.subr.bf16.mxu0 0
    %48 = vmatpush1.bf16.msra.mxu0 0
    %49 = vmatprep.subr.bf16.mxu0 0
    %50 = vmatpush1.bf16.msra.mxu0 0
    %51 = vmatprep.subr.bf16.mxu0 0
    %52 = vmatpush1.bf16.msra.mxu0 0
    %53 = vmatprep.subr.bf16.mxu0 0
    %54 = vmatpush1.bf16.msra.mxu0 0
    %55 = vmatprep.subr.bf16.mxu0 0
    %56 = vmatpush1.bf16.msra.mxu0 0
    %57 = vmatprep.subr.bf16.mxu0 0
    %58 = vmatpush1.bf16.msra.mxu0 0
    %59 = vmatprep.subr.bf16.mxu0 0
    %60 = vmatpush1.bf16.msra.mxu0 0
    %61 = vmatprep.subr.bf16.mxu0 0
    %62 = vmatpush1.bf16.msra.mxu0 0
    %63 = vmatprep.subr.bf16.mxu0 0
    %64 = vmatpush1.bf16.msra.mxu0 0
    %65 = vmatprep.subr.bf16.mxu0 0
    %66 = vmatpush1.bf16.msra.mxu0 0
    %67 = vmatprep.subr.bf16.mxu0 0
    %68 = vmatpush1.bf16.msra.mxu0 0
    %69 = vmatprep.subr.bf16.mxu0 0
    %70 = vmatpush1.bf16.msra.mxu0 0
    %71 = vmatprep.subr.bf16.mxu0 0
    %72 = vmatpush1.bf16.msra.mxu0 0
    %73 = vmatprep.subr.bf16.mxu0 0
    %74 = vmatpush1.bf16.msra.mxu0 0
    %75 = vmatprep.mubr.bf16.mxu0 0
    %76 = vmatmul.mubr.bf16.gmra.mrb[0].mxu0 %v34
    %v77 = vpop.f32.mrb[0].mxu0
    %v78 = vadd.f32 %v30, %v77
    %v79 = vpop.f32.mrb[0].mxu0
    %v80 = vpop.f32.mrb[0].mxu0
    %v81 = vpop.f32.mrb[0].mxu0
    %82 = vdwg.mxu0
    %v83 = vmax.f32 %v78, 0.0
    %v84 = vpack.c.bf16 %v83, %v83
    %v85 = vld [vmem:[%s3] sm:$0xf]
    %v86 = vld [vmem:[%s3 + $0x4] sm:$0xf]
    %v87 = vld [vmem:[%s3 + $0x8] sm:$0xf]
    %v88 = vld [vmem:[%s3 + $0xc] sm:$0xf]
    %v89 = vld [vmem:[%s3 + $0x10] sm:$0xf]
    %v90 = vld [vmem:[%s3 + $0x14] sm:$0xf]
    %v91 = vld [vmem:[%s3 + $0x18] sm:$0xf]
    %v92 = vld [vmem:[%s3 + $0x1c] sm:$0xf]
    %v93 = vld [vmem:[%s4] sm:$0x1]
    %v95 = vlaneseq
    %v96 = vshrl.u32 %v95, 7
    %v97 = vsub.s32 0, %v96
    %v98 = vrot.slane %v93, %v97
    %v108 = vunpack.c.l.b16 %v85
    %v109 = vunpack.c.l.b16 %v86
    %v110 = vunpack.c.l.b16 %v87
    %v111 = vunpack.c.l.b16 %v88
    %v112 = vunpack.c.l.b16 %v89
    %v113 = vunpack.c.l.b16 %v90
    %v114 = vunpack.c.l.b16 %v91
    %v115 = vunpack.c.l.b16 %v92
    %v116 = vpack.c.b16 %v109, %v108
    %v117 = vpack.c.b16 %v111, %v110
    %v118 = vpack.c.b16 %v113, %v112
    %v119 = vpack.c.b16 %v115, %v114
    %vm124 = vcmask 523264
    %v126 = vsel %vm124, %v84, 0
    %128 = vmatprep.subr.bf16.mxu0 0
    %129 = vmatpush1.bf16.msra.mxu0 %v116
    %130 = vmatprep.subr.bf16.mxu0 0
    %131 = vmatpush1.bf16.msra.mxu0 %v117
    %132 = vmatprep.subr.bf16.mxu0 0
    %133 = vmatpush1.bf16.msra.mxu0 %v118
    %134 = vmatprep.subr.bf16.mxu0 0
    %135 = vmatpush1.bf16.msra.mxu0 %v119
    %136 = vmatprep.subr.bf16.mxu0 0
    %137 = vmatpush1.bf16.msra.mxu0 0
    %138 = vmatprep.subr.bf16.mxu0 0
    %139 = vmatpush1.bf16.msra.mxu0 0
    %140 = vmatprep.subr.bf16.mxu0 0
    %141 = vmatpush1.bf16.msra.mxu0 0
    %142 = vmatprep.subr.bf16.mxu0 0
    %143 = vmatpush1.bf16.msra.mxu0 0
    %144 = vmatprep.subr.bf16.mxu0 0
    %145 = vmatpush1.bf16.msra.mxu0 0
    %146 = vmatprep.subr.bf16.mxu0 0
    %147 = vmatpush1.bf16.msra.mxu0 0
    %148 = vmatprep.subr.bf16.mxu0 0
    %149 = vmatpush1.bf16.msra.mxu0 0
    %150 = vmatprep.subr.bf16.mxu0 0
    %151 = vmatpush1.bf16.msra.mxu0 0
    %152 = vmatprep.subr.bf16.mxu0 0
    %153 = vmatpush1.bf16.msra.mxu0 0
    %154 = vmatprep.subr.bf16.mxu0 0
    %155 = vmatpush1.bf16.msra.mxu0 0
    %156 = vmatprep.subr.bf16.mxu0 0
    %157 = vmatpush1.bf16.msra.mxu0 0
    %158 = vmatprep.subr.bf16.mxu0 0
    %159 = vmatpush1.bf16.msra.mxu0 0
    %160 = vmatprep.mubr.bf16.mxu0 0
    %161 = vmatmul.mubr.bf16.gmra.mrb[0].mxu0 %v126
    %v162 = vpop.f32.mrb[0].mxu0
    %v163 = vadd.f32 %v98, %v162
    %v164 = vpop.f32.mrb[0].mxu0
    %v165 = vpop.f32.mrb[0].mxu0
    %v166 = vpop.f32.mrb[0].mxu0
    %167 = vdwg.mxu0
    %vm168 = vcmask 179200
    %169 = vst.msk [vmem:[#allocation2] sm:$0xff] %vm168, %v163
    // Predicated region
    $region22: #{mlp1_forward.1} parent=1 // pred_check
      _
    $region23: #{mlp1_forward.1} parent=1 // pred_check_branch
      %171 = sbr.rel (0) target = $region25
    $region24: #{mlp1_forward.1} parent=1 // pred_region
      %s173 = ssub.s32 128, 128
      %174 = vsyncadd [#allocation3], %s173
      %s176 = sshll.u32 [#allocation2], 4
      %s177 = int_to_ptr.vmem [resolvable:$true] %s176
      %179 = dma.vmem_to_hbm [thread:$0]  %s177, 128, %s5, [#allocation3]
    $region25: #{mlp1_forward.1} parent=1 // pred_fallthru
      _
    // Predicated region
    $region26: #{mlp1_forward.1} parent=1 // pred_check
      _
    $region27: #{mlp1_forward.1} parent=1 // pred_check_branch
      %181 = sbr.rel (0) target = $region29
    $region28: #{mlp1_forward.1} parent=1 // pred_region
      %182 = dma.done [#allocation3], 128
    $region29: #{mlp1_forward.1} parent=1 // pred_fallthru
      _
    %183 = vsyncpa [#allocation3], 1

</llo_original>
